<compile_context>
chip_gen: v5e
topology: v5e:2x2
jax: 0.10.0
libtpu: 0.0.40
codegen_flags: <defaults>
</compile_context>

<pallas_src>
import functools

import jax
import jax.numpy as jnp
from jax.experimental import pallas as pl
from jax.experimental.pallas import tpu as pltpu


SMALL_N = 256                      # below this, run the single-invocation path
CONV_TILE = 256                    # streaming-conv tile edge / padding granularity
DEFAULT_TILE_MN = 512              # bmm output tile edge (v5e sweet spot, v7x-safe)
DEFAULT_TILE_K = 512               # bmm reduction tile edge
VMEM_LIMIT = 32 * 1024 * 1024      # explicit scoped-VMEM budget, safe on v5e/v6e/v7x

# Squeezed-dim sentinel for BlockSpec (falls back to the legacy `None` sentinel).
_SQ = getattr(pl, "Squeezed", lambda: None)()


def _spec(block_shape, index_map, *, memory_space=None, buffers=None):
    """BlockSpec helper: optionally requests deeper pipelining via pl.Buffered."""
    kw = {}
    if memory_space is not None:
        kw["memory_space"] = memory_space
    if buffers is not None and hasattr(pl, "Buffered"):
        try:
            return pl.BlockSpec(block_shape, index_map,
                                pipeline_mode=pl.Buffered(buffers), **kw)
        except TypeError:
            pass  # older BlockSpec signature without pipeline_mode
    return pl.BlockSpec(block_shape, index_map, **kw)


def _pick_tile(np_dim, max_tile):
    """Largest multiple of CONV_TILE that is <= max_tile and divides np_dim."""
    t = min(max_tile, np_dim)
    t = (t // CONV_TILE) * CONV_TILE
    while t > CONV_TILE and np_dim % t:
        t -= CONV_TILE
    return max(t, CONV_TILE)


# ---------------------------------------------------------------------------
# Small-N kernels: single grid step, static loop over C_out inside the kernel.
# A channel slabs are loaded once (hoisted out of the o loop) and reused.
# ---------------------------------------------------------------------------
def _small_first_kernel(w1_ref, w2_ref, A_ref, H_ref):
    c_out = H_ref.shape[0]
    c_in = A_ref.shape[0]
    A_ch = [A_ref[c] for c in range(c_in)]          # hoisted: one load per channel
    for o in range(c_out):                           # static unroll, C_out is tiny
        a = w1_ref[o, 0] * A_ch[0]
        b = w2_ref[o, 0] * A_ch[0]
        for c in range(1, c_in):                     # static unroll, C_in is tiny
            a = a + w1_ref[o, c] * A_ch[c]
            b = b + w2_ref[o, c] * A_ch[c]
        H_ref[o] = jnp.dot(a, b,
                           preferred_element_type=jnp.float32).astype(H_ref.dtype)


def _small_notfirst_kernel(w1_ref, A_ref, Hprev_ref, H_ref):
    c_out = H_ref.shape[0]
    c_in = A_ref.shape[0]
    A_ch = [A_ref[c] for c in range(c_in)]
    for o in range(c_out):
        a = w1_ref[o, 0] * A_ch[0]
        for c in range(1, c_in):
            a = a + w1_ref[o, c] * A_ch[c]
        H_ref[o] = jnp.dot(Hprev_ref[o], a,
                           preferred_element_type=jnp.float32).astype(H_ref.dtype)


def _small_first(w1, w2, A):
    C_out, C_in = w1.shape
    _, N, _ = A.shape
    return pl.pallas_call(
        _small_first_kernel,
        out_shape=jax.ShapeDtypeStruct((C_out, N, N), jnp.float32),
        grid=(1,),
        in_specs=[
            pl.BlockSpec((C_out, C_in), lambda _: (0, 0), memory_space=pltpu.SMEM),
            pl.BlockSpec((C_out, C_in), lambda _: (0, 0), memory_space=pltpu.SMEM),
            pl.BlockSpec((C_in, N, N), lambda _: (0, 0, 0)),
        ],
        out_specs=pl.BlockSpec((C_out, N, N), lambda _: (0, 0, 0)),
        compiler_params=pltpu.CompilerParams(
            dimension_semantics=("arbitrary",),
            vmem_limit_bytes=VMEM_LIMIT),
    )(w1, w2, A)


def _small_notfirst(w1, A, H_prev):
    C_out, C_in = w1.shape
    _, N, _ = A.shape
    return pl.pallas_call(
        _small_notfirst_kernel,
        out_shape=jax.ShapeDtypeStruct((C_out, N, N), jnp.float32),
        grid=(1,),
        in_specs=[
            pl.BlockSpec((C_out, C_in), lambda _: (0, 0), memory_space=pltpu.SMEM),
            pl.BlockSpec((C_in, N, N), lambda _: (0, 0, 0)),
            pl.BlockSpec((C_out, N, N), lambda _: (0, 0, 0)),
        ],
        out_specs=pl.BlockSpec((C_out, N, N), lambda _: (0, 0, 0)),
        compiler_params=pltpu.CompilerParams(
            dimension_semantics=("arbitrary",),
            vmem_limit_bytes=VMEM_LIMIT),
    )(w1, A, H_prev)


# ---------------------------------------------------------------------------
# Tiled path, pass 1: GTConv — softmax-weighted sum over edge types, tile-wise.
# Outputs are emitted in the matmul dtype (bf16 by default).
# ---------------------------------------------------------------------------
def _conv_dual_kernel(w1_ref, w2_ref, A_ref, a_ref, b_ref):
    o = pl.program_id(2)
    c_in = A_ref.shape[0]
    A0 = A_ref[0]
    a = w1_ref[o, 0] * A0
    b = w2_ref[o, 0] * A0
    for c in range(1, c_in):
        Ac = A_ref[c]                      # one load per channel, reused for a & b
        a = a + w1_ref[o, c] * Ac
        b = b + w2_ref[o, c] * Ac
    a_ref[...] = a.astype(a_ref.dtype)
    b_ref[...] = b.astype(b_ref.dtype)


def _conv_single_kernel(w_ref, A_ref, a_ref):
    o = pl.program_id(2)
    c_in = A_ref.shape[0]
    a = w_ref[o, 0] * A_ref[0]
    for c in range(1, c_in):
        a = a + w_ref[o, c] * A_ref[c]
    a_ref[...] = a.astype(a_ref.dtype)


def _conv_tiled(w_list, A, tile, out_dtype):
    """Materialize conv output(s) (C_out, Np, Np) in out_dtype for each weight matrix."""
    C_out, C_in = w_list[0].shape
    _, Np, _ = A.shape
    g = Np // tile
    grid = (g, g, C_out)             # o innermost -> A tile reused across channels
    A_spec = _spec((C_in, tile, tile), lambda i, j, o: (0, i, j), buffers=3)
    w_spec = pl.BlockSpec((C_out, C_in), lambda i, j, o: (0, 0),
                          memory_space=pltpu.SMEM)
    out_spec = pl.BlockSpec((_SQ, tile, tile), lambda i, j, o: (o, i, j))
    out_shape = jax.ShapeDtypeStruct((C_out, Np, Np), out_dtype)
    params = pltpu.CompilerParams(
        dimension_semantics=("parallel", "parallel", "parallel"),
        vmem_limit_bytes=VMEM_LIMIT)

    if len(w_list) == 2:
        a, b = pl.pallas_call(
            _conv_dual_kernel,
            out_shape=(out_shape, out_shape),
            grid=grid,
            in_specs=[w_spec, w_spec, A_spec],
            out_specs=(out_spec, out_spec),
            compiler_params=params,
        )(w_list[0], w_list[1], A)
        return a, b
    else:
        a = pl.pallas_call(
            _conv_single_kernel,
            out_shape=out_shape,
            grid=grid,
            in_specs=[w_spec, A_spec],
            out_specs=out_spec,
            compiler_params=params,
        )(w_list[0], A)
        return (a,)


# ---------------------------------------------------------------------------
# Tiled path, pass 2: batched matmul H[o] = lhs[o] @ rhs[o], k-innermost
# reduction accumulating directly into the resident f32 output block.
# ---------------------------------------------------------------------------
def _bmm_kernel(a_ref, b_ref, o_ref):
    k = pl.program_id(3)

    @pl.when(k == 0)
    def _init():
        o_ref[...] = jnp.zeros_like(o_ref)

    o_ref[...] += jnp.dot(a_ref[...], b_ref[...],
                          preferred_element_type=jnp.float32)


def _bmm_tiled(lhs, rhs, tile_m, tile_n, tile_k):
    C_out, Np, _ = lhs.shape
    gi, gj, gk = Np // tile_m, Np // tile_n, Np // tile_k
    in_bytes = lhs.dtype.itemsize
    cost = pl.CostEstimate(
        flops=2 * C_out * Np * Np * Np,
        transcendentals=0,
        bytes_accessed=in_bytes * C_out * Np * Np * (gi + gj)
                       + 4 * C_out * Np * Np)
    return pl.pallas_call(
        _bmm_kernel,
        out_shape=jax.ShapeDtypeStruct((C_out, Np, Np), jnp.float32),
        grid=(C_out, gi, gj, gk),
        in_specs=[
            pl.BlockSpec((_SQ, tile_m, tile_k), lambda o, i, j, k: (o, i, k)),
            pl.BlockSpec((_SQ, tile_k, tile_n), lambda o, i, j, k: (o, k, j)),
        ],
        out_specs=pl.BlockSpec((_SQ, tile_m, tile_n), lambda o, i, j, k: (o, i, j)),
        compiler_params=pltpu.CompilerParams(
            dimension_semantics=("parallel", "parallel", "parallel", "arbitrary"),
            vmem_limit_bytes=VMEM_LIMIT),
        cost_estimate=cost,
    )(lhs, rhs)


# ---------------------------------------------------------------------------
# Public wrapper mirroring GTLayer.forward.
# ---------------------------------------------------------------------------
def gt_layer_forward(A, weight1, weight2=None, H_prev=None, first=True,
                     mm_dtype=jnp.bfloat16,
                     max_tile_mn=DEFAULT_TILE_MN, max_tile_k=DEFAULT_TILE_K):
    """A: (C_in, N, N); weight*: (C_out, C_in, 1, 1); H_prev: (C_out, N, N).

    Tiled path (N > SMALL_N): matmul operands are stored/streamed in `mm_dtype`
    (bf16 default, ~2x HBM and MXU throughput; accumulation stays f32, so expect
    ~bf16-level relative error ~1e-2).  Pass mm_dtype=jnp.float32 for full precision.
    Small path always computes in f32.
    Returns (H, W): H (C_out, N, N) f32, W list of softmaxed conv weights."""
    C_in, N, _ = A.shape
    C_out = weight1.shape[0]

    w1_soft = jax.nn.softmax(weight1, axis=1)
    w1_flat = w1_soft[:, :, 0, 0]
    if first:
        assert weight2 is not None
        w2_soft = jax.nn.softmax(weight2, axis=1)
        w2_flat = w2_soft[:, :, 0, 0]
        W = [w1_soft, w2_soft]
    else:
        assert H_prev is not None
        W = [w1_soft]

    if N <= SMALL_N:
        # Pad N up to the 128-lane width: unmasked full-lane stores, padding is
        # inert in the matmul (zero rows/cols contribute nothing).
        Ns = pl.cdiv(N, 128) * 128
        pad = Ns - N
        A_s = jnp.pad(A, ((0, 0), (0, pad), (0, pad))) if pad else A
        if first:
            H = _small_first(w1_flat, w2_flat, A_s)
        else:
            Hp_s = jnp.pad(H_prev, ((0, 0), (0, pad), (0, pad))) if pad else H_prev
            H = _small_notfirst(w1_flat, A_s, Hp_s)
        if pad:
            H = H[:, :N, :N]
        return H, W

    # Tiled path: zero-pad N up to a multiple of CONV_TILE (padding inert in the bmm).
    Np = pl.cdiv(N, CONV_TILE) * CONV_TILE
    pad = Np - N
    A_p = jnp.pad(A, ((0, 0), (0, pad), (0, pad))) if pad else A

    tile_m = _pick_tile(Np, max_tile_mn)
    tile_k = _pick_tile(Np, max_tile_k)

    if first:
        a, b = _conv_tiled([w1_flat, w2_flat], A_p, CONV_TILE, mm_dtype)
        H_p = _bmm_tiled(a, b, tile_m, tile_m, tile_k)
    else:
        # Cast H_prev to the matmul dtype ONCE here (no per-step casts in-kernel).
        Hprev_p = H_prev.astype(mm_dtype)
        if pad:
            Hprev_p = jnp.pad(Hprev_p, ((0, 0), (0, pad), (0, pad)))
        (a,) = _conv_tiled([w1_flat], A_p, CONV_TILE, mm_dtype)
        H_p = _bmm_tiled(Hprev_p, a, tile_m, tile_m, tile_k)

    H = H_p[:, :N, :N] if pad else H_p
    return H, W


# ---------------------------------------------------------------------------
# Pure-JAX references.
# ---------------------------------------------------------------------------
def _reference_first(A, weight1, weight2):
    w1 = jax.nn.softmax(weight1, axis=1)
    w2 = jax.nn.softmax(weight2, axis=1)
    a = jnp.sum(A[None] * w1, axis=1)
    b = jnp.sum(A[None] * w2, axis=1)
    return jnp.einsum('onk,okm->onm', a, b, precision=jax.lax.Precision.HIGHEST)


def _reference_notfirst(A, weight1, H_prev):
    w1 = jax.nn.softmax(weight1, axis=1)
    a = jnp.sum(A[None] * w1, axis=1)
    return jnp.einsum('onk,okm->onm', H_prev, a, precision=jax.lax.Precision.HIGHEST)


if __name__ == "__main__":
    key = jax.random.PRNGKey(0)
    k0, k1, k2, k3, k4 = jax.random.split(key, 5)

    # ---- 1) small-N regime (single-invocation path), module-consistent shapes ----
    C_in, C_out, N = 4, 2, 16
    A = jax.random.uniform(k0, (C_in, N, N), dtype=jnp.float32)
    # GTConv.reset_parameters initializes weights to the constant 0.1
    weight1 = jnp.full((C_out, C_in, 1, 1), 0.1, dtype=jnp.float32)
    weight2 = jnp.full((C_out, C_in, 1, 1), 0.1, dtype=jnp.float32)

    H1, W1 = gt_layer_forward(A, weight1, weight2, first=True)
    H1 = jax.block_until_ready(H1)
    ref1 = _reference_first(A, weight1, weight2)
    assert jnp.allclose(H1, ref1, atol=1e-4, rtol=1e-4), "small first=True mismatch"

    H2, W2 = gt_layer_forward(A, weight1, H_prev=H1, first=False)
    H2 = jax.block_until_ready(H2)
    ref2 = _reference_notfirst(A, weight1, H1)
    assert jnp.allclose(H2, ref2, atol=1e-4, rtol=1e-4), "small first=False mismatch"

    # ---- 2) tiled path (N multiple of the tile), bf16 operands, first=True ----
    Nt = 512
    At = jax.random.uniform(k1, (C_in, Nt, Nt), dtype=jnp.float32)
    wt1 = 0.5 * jax.random.normal(k2, (C_out, C_in, 1, 1), dtype=jnp.float32)
    wt2 = 0.5 * jax.random.normal(k3, (C_out, C_in, 1, 1), dtype=jnp.float32)
    H3, _ = gt_layer_forward(At, wt1, wt2, first=True)        # mm_dtype=bf16 default
    H3 = jax.block_until_ready(H3)
    ref3 = _reference_first(At, wt1, wt2)
    # bf16 operands (f32 accumulation): ~1% relative tolerance
    assert jnp.allclose(H3, ref3, atol=0.1, rtol=2e-2), "tiled bf16 first=True mismatch"

    # ---- 3) tiled path with padding (N not a tile multiple), bf16, first=False ----
    Nr = 320
    Ar = jax.random.uniform(k4, (C_in, Nr, Nr), dtype=jnp.float32)
    Hprev = jax.random.uniform(k0, (C_out, Nr, Nr), dtype=jnp.float32)
    H4, _ = gt_layer_forward(Ar, wt1, H_prev=Hprev, first=False)
    H4 = jax.block_until_ready(H4)
    ref4 = _reference_notfirst(Ar, wt1, Hprev)
    assert jnp.allclose(H4, ref4, atol=0.1, rtol=2e-2), "tiled bf16 first=False mismatch"

    # ---- 4) tiled path in full f32 (mm_dtype override), padded N, first=True ----
    H5, _ = gt_layer_forward(Ar, wt1, wt2, first=True, mm_dtype=jnp.float32)
    H5 = jax.block_until_ready(H5)
    ref5 = _reference_first(Ar, wt1, wt2)
    assert jnp.allclose(H5, ref5, atol=5e-2, rtol=5e-3), "tiled f32 first=True mismatch"

    print("KERNEL_OK")
</pallas_src>

<mosaic_0001>
module attributes {stable_mosaic.version = 11 : i64} {
  func.func @_small_first_kernel(%arg0: i32, %arg1: memref<2x4xf32, #tpu.memory_space<smem>>, %arg2: memref<2x4xf32, #tpu.memory_space<smem>>, %arg3: memref<4x128x128xf32, #tpu.memory_space<vmem>>, %arg4: memref<2x128x128xf32, #tpu.memory_space<vmem>>) attributes {dimension_semantics = [#tpu.dimension_semantics<arbitrary>], iteration_bounds = array<i64: 1>, scalar_prefetch = 0 : i64, scratch_operands = 0 : i64, tpu.core_type = #tpu.core_type<tc>, window_params = [{transform_indices = @transform_0, window_bounds = array<i64: 2, 4>}, {transform_indices = @transform_1, window_bounds = array<i64: 2, 4>}, {pipeline_mode = #tpu.pipeline_mode<synchronous>, transform_indices = @transform_2, window_bounds = array<i64: 4, 128, 128>}, {pipeline_mode = #tpu.pipeline_mode<synchronous>, transform_indices = @transform_3, window_bounds = array<i64: 2, 128, 128>}]} {
    %c0 = arith.constant 0 : index
    %c0_0 = arith.constant 0 : index
    %c0_1 = arith.constant 0 : index
    %0 = vector.load %arg3[%c0, %c0_0, %c0_1] : memref<4x128x128xf32, #tpu.memory_space<vmem>>, vector<1x128x128xf32>
    %1 = vector.shape_cast %0 : vector<1x128x128xf32> to vector<128x128xf32>
    %c1 = arith.constant 1 : index
    %c0_2 = arith.constant 0 : index
    %c0_3 = arith.constant 0 : index
    %2 = vector.load %arg3[%c1, %c0_2, %c0_3] : memref<4x128x128xf32, #tpu.memory_space<vmem>>, vector<1x128x128xf32>
    %3 = vector.shape_cast %2 : vector<1x128x128xf32> to vector<128x128xf32>
    %c2 = arith.constant 2 : index
    %c0_4 = arith.constant 0 : index
    %c0_5 = arith.constant 0 : index
    %4 = vector.load %arg3[%c2, %c0_4, %c0_5] : memref<4x128x128xf32, #tpu.memory_space<vmem>>, vector<1x128x128xf32>
    %5 = vector.shape_cast %4 : vector<1x128x128xf32> to vector<128x128xf32>
    %c3 = arith.constant 3 : index
    %c0_6 = arith.constant 0 : index
    %c0_7 = arith.constant 0 : index
    %6 = vector.load %arg3[%c3, %c0_6, %c0_7] : memref<4x128x128xf32, #tpu.memory_space<vmem>>, vector<1x128x128xf32>
    %7 = vector.shape_cast %6 : vector<1x128x128xf32> to vector<128x128xf32>
    %c0_8 = arith.constant 0 : index
    %c0_9 = arith.constant 0 : index
    %8 = memref.load %arg1[%c0_8, %c0_9] : memref<2x4xf32, #tpu.memory_space<smem>>
    %9 = vector.broadcast %8 : f32 to vector<128x128xf32>
    %10 = arith.mulf %9, %1 : vector<128x128xf32>
    %c0_10 = arith.constant 0 : index
    %c0_11 = arith.constant 0 : index
    %11 = memref.load %arg2[%c0_10, %c0_11] : memref<2x4xf32, #tpu.memory_space<smem>>
    %12 = vector.broadcast %11 : f32 to vector<128x128xf32>
    %13 = arith.mulf %12, %1 : vector<128x128xf32>
    %c0_12 = arith.constant 0 : index
    %c1_13 = arith.constant 1 : index
    %14 = memref.load %arg1[%c0_12, %c1_13] : memref<2x4xf32, #tpu.memory_space<smem>>
    %15 = vector.broadcast %14 : f32 to vector<128x128xf32>
    %16 = arith.mulf %15, %3 : vector<128x128xf32>
    %17 = arith.addf %10, %16 : vector<128x128xf32>
    %c0_14 = arith.constant 0 : index
    %c1_15 = arith.constant 1 : index
    %18 = memref.load %arg2[%c0_14, %c1_15] : memref<2x4xf32, #tpu.memory_space<smem>>
    %19 = vector.broadcast %18 : f32 to vector<128x128xf32>
    %20 = arith.mulf %19, %3 : vector<128x128xf32>
    %21 = arith.addf %13, %20 : vector<128x128xf32>
    %c0_16 = arith.constant 0 : index
    %c2_17 = arith.constant 2 : index
    %22 = memref.load %arg1[%c0_16, %c2_17] : memref<2x4xf32, #tpu.memory_space<smem>>
    %23 = vector.broadcast %22 : f32 to vector<128x128xf32>
    %24 = arith.mulf %23, %5 : vector<128x128xf32>
    %25 = arith.addf %17, %24 : vector<128x128xf32>
    %c0_18 = arith.constant 0 : index
    %c2_19 = arith.constant 2 : index
    %26 = memref.load %arg2[%c0_18, %c2_19] : memref<2x4xf32, #tpu.memory_space<smem>>
    %27 = vector.broadcast %26 : f32 to vector<128x128xf32>
    %28 = arith.mulf %27, %5 : vector<128x128xf32>
    %29 = arith.addf %21, %28 : vector<128x128xf32>
    %c0_20 = arith.constant 0 : index
    %c3_21 = arith.constant 3 : index
    %30 = memref.load %arg1[%c0_20, %c3_21] : memref<2x4xf32, #tpu.memory_space<smem>>
    %31 = vector.broadcast %30 : f32 to vector<128x128xf32>
    %32 = arith.mulf %31, %7 : vector<128x128xf32>
    %33 = arith.addf %25, %32 : vector<128x128xf32>
    %c0_22 = arith.constant 0 : index
    %c3_23 = arith.constant 3 : index
    %34 = memref.load %arg2[%c0_22, %c3_23] : memref<2x4xf32, #tpu.memory_space<smem>>
    %35 = vector.broadcast %34 : f32 to vector<128x128xf32>
    %36 = arith.mulf %35, %7 : vector<128x128xf32>
    %37 = arith.addf %29, %36 : vector<128x128xf32>
    %cst = arith.constant dense<0.000000e+00> : vector<128x128xf32>
    %38 = tpu.matmul %33, %37, %cst {dimension_numbers = #tpu.dot_dimension_numbers<[1], [0], [0], [1], [0, 0, 1, 1], [], []>} : vector<128x128xf32>, vector<128x128xf32>, vector<128x128xf32> -> vector<128x128xf32>
    %c0_24 = arith.constant 0 : index
    %c0_25 = arith.constant 0 : index
    %c0_26 = arith.constant 0 : index
    %39 = vector.load %arg4[%c0_24, %c0_25, %c0_26] : memref<2x128x128xf32, #tpu.memory_space<vmem>>, vector<1x128x128xf32>
    %40 = vector.shape_cast %39 : vector<1x128x128xf32> to vector<128x128xf32>
    %41 = vector.shape_cast %38 : vector<128x128xf32> to vector<1x128x128xf32>
    tpu.vector_store %arg4[%c0_24, %c0_25, %c0_26], %41 {strides = array<i32>} : memref<2x128x128xf32, #tpu.memory_space<vmem>>, vector<1x128x128xf32>,
    %c1_27 = arith.constant 1 : index
    %c0_28 = arith.constant 0 : index
    %42 = memref.load %arg1[%c1_27, %c0_28] : memref<2x4xf32, #tpu.memory_space<smem>>
    %43 = vector.broadcast %42 : f32 to vector<128x128xf32>
    %44 = arith.mulf %43, %1 : vector<128x128xf32>
    %c1_29 = arith.constant 1 : index
    %c0_30 = arith.constant 0 : index
    %45 = memref.load %arg2[%c1_29, %c0_30] : memref<2x4xf32, #tpu.memory_space<smem>>
    %46 = vector.broadcast %45 : f32 to vector<128x128xf32>
    %47 = arith.mulf %46, %1 : vector<128x128xf32>
    %c1_31 = arith.constant 1 : index
    %c1_32 = arith.constant 1 : index
    %48 = memref.load %arg1[%c1_31, %c1_32] : memref<2x4xf32, #tpu.memory_space<smem>>
    %49 = vector.broadcast %48 : f32 to vector<128x128xf32>
    %50 = arith.mulf %49, %3 : vector<128x128xf32>
    %51 = arith.addf %44, %50 : vector<128x128xf32>
    %c1_33 = arith.constant 1 : index
    %c1_34 = arith.constant 1 : index
    %52 = memref.load %arg2[%c1_33, %c1_34] : memref<2x4xf32, #tpu.memory_space<smem>>
    %53 = vector.broadcast %52 : f32 to vector<128x128xf32>
    %54 = arith.mulf %53, %3 : vector<128x128xf32>
    %55 = arith.addf %47, %54 : vector<128x128xf32>
    %c1_35 = arith.constant 1 : index
    %c2_36 = arith.constant 2 : index
    %56 = memref.load %arg1[%c1_35, %c2_36] : memref<2x4xf32, #tpu.memory_space<smem>>
    %57 = vector.broadcast %56 : f32 to vector<128x128xf32>
    %58 = arith.mulf %57, %5 : vector<128x128xf32>
    %59 = arith.addf %51, %58 : vector<128x128xf32>
    %c1_37 = arith.constant 1 : index
    %c2_38 = arith.constant 2 : index
    %60 = memref.load %arg2[%c1_37, %c2_38] : memref<2x4xf32, #tpu.memory_space<smem>>
    %61 = vector.broadcast %60 : f32 to vector<128x128xf32>
    %62 = arith.mulf %61, %5 : vector<128x128xf32>
    %63 = arith.addf %55, %62 : vector<128x128xf32>
    %c1_39 = arith.constant 1 : index
    %c3_40 = arith.constant 3 : index
    %64 = memref.load %arg1[%c1_39, %c3_40] : memref<2x4xf32, #tpu.memory_space<smem>>
    %65 = vector.broadcast %64 : f32 to vector<128x128xf32>
    %66 = arith.mulf %65, %7 : vector<128x128xf32>
    %67 = arith.addf %59, %66 : vector<128x128xf32>
    %c1_41 = arith.constant 1 : index
    %c3_42 = arith.constant 3 : index
    %68 = memref.load %arg2[%c1_41, %c3_42] : memref<2x4xf32, #tpu.memory_space<smem>>
    %69 = vector.broadcast %68 : f32 to vector<128x128xf32>
    %70 = arith.mulf %69, %7 : vector<128x128xf32>
    %71 = arith.addf %63, %70 : vector<128x128xf32>
    %cst_43 = arith.constant dense<0.000000e+00> : vector<128x128xf32>
    %72 = tpu.matmul %67, %71, %cst_43 {dimension_numbers = #tpu.dot_dimension_numbers<[1], [0], [0], [1], [0, 0, 1, 1], [], []>} : vector<128x128xf32>, vector<128x128xf32>, vector<128x128xf32> -> vector<128x128xf32>
    %c1_44 = arith.constant 1 : index
    %c0_45 = arith.constant 0 : index
    %c0_46 = arith.constant 0 : index
    %73 = vector.load %arg4[%c1_44, %c0_45, %c0_46] : memref<2x128x128xf32, #tpu.memory_space<vmem>>, vector<1x128x128xf32>
    %74 = vector.shape_cast %73 : vector<1x128x128xf32> to vector<128x128xf32>
    %75 = vector.shape_cast %72 : vector<128x128xf32> to vector<1x128x128xf32>
    tpu.vector_store %arg4[%c1_44, %c0_45, %c0_46], %75 {strides = array<i32>} : memref<2x128x128xf32, #tpu.memory_space<vmem>>, vector<1x128x128xf32>,
    return
  }
  func.func @transform_0(%arg0: i32) -> (i32, i32) {
    %c0_i32 = arith.constant 0 : i32
    %c0_i32_0 = arith.constant 0 : i32
    %c0_i32_1 = arith.constant 0 : i32
    return %c0_i32, %c0_i32_0 : i32, i32
  }
  func.func @transform_1(%arg0: i32) -> (i32, i32) {
    %c0_i32 = arith.constant 0 : i32
    %c0_i32_0 = arith.constant 0 : i32
    %c0_i32_1 = arith.constant 0 : i32
    return %c0_i32, %c0_i32_0 : i32, i32
  }
  func.func @transform_2(%arg0: i32) -> (i32, i32, i32) {
    %c0_i32 = arith.constant 0 : i32
    %c0_i32_0 = arith.constant 0 : i32
    %c0_i32_1 = arith.constant 0 : i32
    %c0_i32_2 = arith.constant 0 : i32
    return %c0_i32, %c0_i32_0, %c0_i32_1 : i32, i32, i32
  }
  func.func @transform_3(%arg0: i32) -> (i32, i32, i32) {
    %c0_i32 = arith.constant 0 : i32
    %c0_i32_0 = arith.constant 0 : i32
    %c0_i32_1 = arith.constant 0 : i32
    %c0_i32_2 = arith.constant 0 : i32
    return %c0_i32, %c0_i32_0, %c0_i32_1 : i32, i32, i32
  }
}

</mosaic_0001>

<llo_original>
// kernel: tpu_custom_call.1
$region0: #{tpu_custom_call.1}
  #allocation0 [shape = 'u32[]', space=smem, size = 0x4, offset = 0x4, fixed_abs, tag = 'smem constant byte address 0x4 - core index']
  #allocation1 [shape = 'u32[72,128]{1,0:T(1,128)}', space=vmem, size = 0x9000, scoped, tag = 'internal scratch']
  %s0 = inlined_call_operand.hbm [shape: f32[2,4], index: 0, kind: input, shape index: {}]
  %s1 = inlined_call_operand.hbm [shape: f32[2,4], index: 1, kind: input, shape index: {}]
  %s2 = inlined_call_operand.hbm [shape: f32[4,128,128], index: 2, kind: input, shape index: {}]
  %s3 = inlined_call_operand.hbm [shape: f32[2,128,128], index: 3, kind: output, shape index: {}]
  %s4 = sld [smem:[#allocation0]]
  $region34: #{tpu_custom_call.1} parent=0
    _
  %s6 = ssub.s32 1, %s4
  %s7 = scalar_select 0, %s6, %s4
  $region1: #{tpu_custom_call.1} parent=0
    #allocation2 [shape = 'u8[1024]{0}', space=smem, size = 0x400, scoped, tag = 'input window, operand 0, single buffered']
    #allocation3 [shape = 's32[1]{0}', space=sflag, size = 0x4, scoped, tag = 'scoped memory for tpu_custom_call.1']
    #allocation4 [shape = 's32[1]{0}', space=sflag, size = 0x4, scoped, tag = 'scoped memory for tpu_custom_call.1']
    #allocation5 [shape = 's32[1]{0}', space=sflag, size = 0x4, scoped, tag = 'scoped memory for tpu_custom_call.1']
    #allocation6 [shape = 'u8[1024]{0}', space=smem, size = 0x400, scoped, tag = 'input window, operand 1, single buffered']
    #allocation7 [shape = 's32[1]{0}', space=sflag, size = 0x4, scoped, tag = 'scoped memory for tpu_custom_call.1']
    #allocation8 [shape = 'u8[262144]{0}', space=vmem, size = 0x40000, scoped, tag = 'input window, operand 2, single buffered']
    #allocation9 [shape = 'u8[131072]{0}', space=vmem, size = 0x20000, scoped, tag = 'output window, operand 0, single buffered']
    %8 = vsyncpa [#allocation5], 0
    %9 = vsyncpa [#allocation7], 0
    %10 = vsyncpa [#allocation3], 0
    %11 = vsyncpa [#allocation4], 0
    // Predicated region
    $region2: #{tpu_custom_call.1} parent=1 // pred_check
      _
    $region3: #{tpu_custom_call.1} parent=1 // pred_check_branch
      %13 = sbr.rel (0) target = $region5
    $region4: #{tpu_custom_call.1} parent=1 // pred_region
      %15 = vsyncadd [#allocation5], 0
      %s17 = sshll.u32 %s0, 4
      %s18 = int_to_ptr.hbm [resolvable:$true] %s17
      %20 = dma.hbm_to_smem %s18, 32, [#allocation2], [#allocation5]
    $region5: #{tpu_custom_call.1} parent=1 // pred_fallthru
      _
    // Predicated region
    $region6: #{tpu_custom_call.1} parent=1 // pred_check
      _
    $region7: #{tpu_custom_call.1} parent=1 // pred_check_branch
      %22 = sbr.rel (0) target = $region9
    $region8: #{tpu_custom_call.1} parent=1 // pred_region
      %24 = vsyncadd [#allocation7], 0
      %s26 = sshll.u32 %s1, 4
      %s27 = int_to_ptr.hbm [resolvable:$true] %s26
      %29 = dma.hbm_to_smem %s27, 32, [#allocation6], [#allocation7]
    $region9: #{tpu_custom_call.1} parent=1 // pred_fallthru
      _
    // Predicated region
    $region10: #{tpu_custom_call.1} parent=1 // pred_check
      _
    $region11: #{tpu_custom_call.1} parent=1 // pred_check_branch
      %31 = sbr.rel (0) target = $region13
    $region12: #{tpu_custom_call.1} parent=1 // pred_region
      %33 = vsyncadd [#allocation3], 0
      %s34 = sshll.u32 %s2, 4
      %s35 = int_to_ptr.hbm [resolvable:$true] %s34
      %s36 = sshll.u32 [#allocation8], 4
      %s37 = int_to_ptr.vmem [resolvable:$true] %s36
      %42 = dma.hbm_to_vmem [thread:$0]  %s35, 8192, %s37, [#allocation3], 128, 128, 8
    $region13: #{tpu_custom_call.1} parent=1 // pred_fallthru
      _
    // Predicated region
    $region14: #{tpu_custom_call.1} parent=1 // pred_check
      _
    $region15: #{tpu_custom_call.1} parent=1 // pred_check_branch
      %44 = sbr.rel (0) target = $region17
    $region16: #{tpu_custom_call.1} parent=1 // pred_region
      %46 = dma.done [#allocation5], 32
    $region17: #{tpu_custom_call.1} parent=1 // pred_fallthru
      _
    // Predicated region
    $region18: #{tpu_custom_call.1} parent=1 // pred_check
      _
    $region19: #{tpu_custom_call.1} parent=1 // pred_check_branch
      %48 = sbr.rel (0) target = $region21
    $region20: #{tpu_custom_call.1} parent=1 // pred_region
      %50 = dma.done [#allocation7], 32
    $region21: #{tpu_custom_call.1} parent=1 // pred_fallthru
      _
    // Predicated region
    $region22: #{tpu_custom_call.1} parent=1 // pred_check
      _
    $region23: #{tpu_custom_call.1} parent=1 // pred_check_branch
      %52 = sbr.rel (0) target = $region25
    $region24: #{tpu_custom_call.1} parent=1 // pred_region
      %54 = dma.done [#allocation3], 8192
    $region25: #{tpu_custom_call.1} parent=1 // pred_fallthru
      _
    %55 = sfence
    %v56 = vld [vmem:[#allocation8] sm:$0xff]
    %v57 = vld [vmem:[#allocation8 + $0x8] sm:$0xff]
    %v58 = vld [vmem:[#allocation8 + $0x10] sm:$0xff]
    %v59 = vld [vmem:[#allocation8 + $0x18] sm:$0xff]
    %v60 = vld [vmem:[#allocation8 + $0x20] sm:$0xff]
    %v61 = vld [vmem:[#allocation8 + $0x28] sm:$0xff]
    %v62 = vld [vmem:[#allocation8 + $0x30] sm:$0xff]
    %v63 = vld [vmem:[#allocation8 + $0x38] sm:$0xff]
    %v64 = vld [vmem:[#allocation8 + $0x40] sm:$0xff]
    %v65 = vld [vmem:[#allocation8 + $0x48] sm:$0xff]
    %v66 = vld [vmem:[#allocation8 + $0x50] sm:$0xff]
    %v67 = vld [vmem:[#allocation8 + $0x58] sm:$0xff]
    %v68 = vld [vmem:[#allocation8 + $0x60] sm:$0xff]
    %v69 = vld [vmem:[#allocation8 + $0x68] sm:$0xff]
    %v70 = vld [vmem:[#allocation8 + $0x70] sm:$0xff]
    %v71 = vld [vmem:[#allocation8 + $0x78] sm:$0xff]
    %s72 = scalar_lea.vmem [#allocation8], 128
    %v73 = vld [vmem:[%s72] sm:$0xff]
    %v74 = vld [vmem:[%s72 + $0x8] sm:$0xff]
    %v75 = vld [vmem:[%s72 + $0x10] sm:$0xff]
    %v76 = vld [vmem:[%s72 + $0x18] sm:$0xff]
    %v77 = vld [vmem:[%s72 + $0x20] sm:$0xff]
    %v78 = vld [vmem:[%s72 + $0x28] sm:$0xff]
    %v79 = vld [vmem:[%s72 + $0x30] sm:$0xff]
    %v80 = vld [vmem:[%s72 + $0x38] sm:$0xff]
    %v81 = vld [vmem:[%s72 + $0x40] sm:$0xff]
    %v82 = vld [vmem:[%s72 + $0x48] sm:$0xff]
    %v83 = vld [vmem:[%s72 + $0x50] sm:$0xff]
    %v84 = vld [vmem:[%s72 + $0x58] sm:$0xff]
    %v85 = vld [vmem:[%s72 + $0x60] sm:$0xff]
    %v86 = vld [vmem:[%s72 + $0x68] sm:$0xff]
    %v87 = vld [vmem:[%s72 + $0x70] sm:$0xff]
    %v88 = vld [vmem:[%s72 + $0x78] sm:$0xff]
    %s89 = scalar_lea.vmem [#allocation8], 256
    %v90 = vld [vmem:[%s89] sm:$0xff]
    %v91 = vld [vmem:[%s89 + $0x8] sm:$0xff]
    %v92 = vld [vmem:[%s89 + $0x10] sm:$0xff]
    %v93 = vld [vmem:[%s89 + $0x18] sm:$0xff]
    %v94 = vld [vmem:[%s89 + $0x20] sm:$0xff]
    %v95 = vld [vmem:[%s89 + $0x28] sm:$0xff]
    %v96 = vld [vmem:[%s89 + $0x30] sm:$0xff]
    %v97 = vld [vmem:[%s89 + $0x38] sm:$0xff]
    %v98 = vld [vmem:[%s89 + $0x40] sm:$0xff]
    %v99 = vld [vmem:[%s89 + $0x48] sm:$0xff]
    %v100 = vld [vmem:[%s89 + $0x50] sm:$0xff]
    %v101 = vld [vmem:[%s89 + $0x58] sm:$0xff]
    %v102 = vld [vmem:[%s89 + $0x60] sm:$0xff]
    %v103 = vld [vmem:[%s89 + $0x68] sm:$0xff]
    %v104 = vld [vmem:[%s89 + $0x70] sm:$0xff]
    %v105 = vld [vmem:[%s89 + $0x78] sm:$0xff]
    %s106 = scalar_lea.vmem [#allocation8], 384
    %v107 = vld [vmem:[%s106] sm:$0xff]
    %v108 = vld [vmem:[%s106 + $0x8] sm:$0xff]
    %v109 = vld [vmem:[%s106 + $0x10] sm:$0xff]
    %v110 = vld [vmem:[%s106 + $0x18] sm:$0xff]
    %v111 = vld [vmem:[%s106 + $0x20] sm:$0xff]
    %v112 = vld [vmem:[%s106 + $0x28] sm:$0xff]
    %v113 = vld [vmem:[%s106 + $0x30] sm:$0xff]
    %v114 = vld [vmem:[%s106 + $0x38] sm:$0xff]
    %v115 = vld [vmem:[%s106 + $0x40] sm:$0xff]
    %v116 = vld [vmem:[%s106 + $0x48] sm:$0xff]
    %v117 = vld [vmem:[%s106 + $0x50] sm:$0xff]
    %v118 = vld [vmem:[%s106 + $0x58] sm:$0xff]
    %v119 = vld [vmem:[%s106 + $0x60] sm:$0xff]
    %v120 = vld [vmem:[%s106 + $0x68] sm:$0xff]
    %v121 = vld [vmem:[%s106 + $0x70] sm:$0xff]
    %v122 = vld [vmem:[%s106 + $0x78] sm:$0xff]
    %s123 = sld [smem:[#allocation2]]
    %v124 = vstv %s123
    %v125 = vmul.f32 %v124, %v56
    %v126 = vmul.f32 %v124, %v57
    %v127 = vmul.f32 %v124, %v58
    %v128 = vmul.f32 %v124, %v59
    %v129 = vmul.f32 %v124, %v60
    %v130 = vmul.f32 %v124, %v61
    %v131 = vmul.f32 %v124, %v62
    %v132 = vmul.f32 %v124, %v63
    %v133 = vmul.f32 %v124, %v64
    %v134 = vmul.f32 %v124, %v65
    %v135 = vmul.f32 %v124, %v66
    %v136 = vmul.f32 %v124, %v67
    %v137 = vmul.f32 %v124, %v68
    %v138 = vmul.f32 %v124, %v69
    %v139 = vmul.f32 %v124, %v70
    %v140 = vmul.f32 %v124, %v71
    %s141 = sld [smem:[#allocation6]]
    %v142 = vstv %s141
    %v143 = vmul.f32 %v142, %v56
    %v144 = vmul.f32 %v142, %v57
    %v145 = vmul.f32 %v142, %v58
    %v146 = vmul.f32 %v142, %v59
    %v147 = vmul.f32 %v142, %v60
    %v148 = vmul.f32 %v142, %v61
    %v149 = vmul.f32 %v142, %v62
    %v150 = vmul.f32 %v142, %v63
    %v151 = vmul.f32 %v142, %v64
    %v152 = vmul.f32 %v142, %v65
    %v153 = vmul.f32 %v142, %v66
    %v154 = vmul.f32 %v142, %v67
    %v155 = vmul.f32 %v142, %v68
    %v156 = vmul.f32 %v142, %v69
    %v157 = vmul.f32 %v142, %v70
    %v158 = vmul.f32 %v142, %v71
    %s159 = sld [smem:[#allocation2 + $0x1]]
    %v160 = vstv %s159
    %v161 = vmul.f32 %v160, %v73
    %v162 = vmul.f32 %v160, %v74
    %v163 = vmul.f32 %v160, %v75
    %v164 = vmul.f32 %v160, %v76
    %v165 = vmul.f32 %v160, %v77
    %v166 = vmul.f32 %v160, %v78
    %v167 = vmul.f32 %v160, %v79
    %v168 = vmul.f32 %v160, %v80
    %v169 = vmul.f32 %v160, %v81
    %v170 = vmul.f32 %v160, %v82
    %v171 = vmul.f32 %v160, %v83
    %v172 = vmul.f32 %v160, %v84
    %v173 = vmul.f32 %v160, %v85
    %v174 = vmul.f32 %v160, %v86
    %v175 = vmul.f32 %v160, %v87
    %v176 = vmul.f32 %v160, %v88
    %v177 = vadd.f32 %v125, %v161
    %v178 = vadd.f32 %v126, %v162
    %v179 = vadd.f32 %v127, %v163
    %v180 = vadd.f32 %v128, %v164
    %v181 = vadd.f32 %v129, %v165
    %v182 = vadd.f32 %v130, %v166
    %v183 = vadd.f32 %v131, %v167
    %v184 = vadd.f32 %v132, %v168
    %v185 = vadd.f32 %v133, %v169
    %v186 = vadd.f32 %v134, %v170
    %v187 = vadd.f32 %v135, %v171
    %v188 = vadd.f32 %v136, %v172
    %v189 = vadd.f32 %v137, %v173
    %v190 = vadd.f32 %v138, %v174
    %v191 = vadd.f32 %v139, %v175
    %v192 = vadd.f32 %v140, %v176
    %s193 = sld [smem:[#allocation6 + $0x1]]
    %v194 = vstv %s193
    %v195 = vmul.f32 %v194, %v73
    %v196 = vmul.f32 %v194, %v74
    %v197 = vmul.f32 %v194, %v75
    %v198 = vmul.f32 %v194, %v76
    %v199 = vmul.f32 %v194, %v77
    %v200 = vmul.f32 %v194, %v78
    %v201 = vmul.f32 %v194, %v79
    %v202 = vmul.f32 %v194, %v80
    %v203 = vmul.f32 %v194, %v81
    %v204 = vmul.f32 %v194, %v82
    %v205 = vmul.f32 %v194, %v83
    %v206 = vmul.f32 %v194, %v84
    %v207 = vmul.f32 %v194, %v85
    %v208 = vmul.f32 %v194, %v86
    %v209 = vmul.f32 %v194, %v87
    %v210 = vmul.f32 %v194, %v88
    %v211 = vadd.f32 %v143, %v195
    %v212 = vadd.f32 %v144, %v196
    %v213 = vadd.f32 %v145, %v197
    %v214 = vadd.f32 %v146, %v198
    %v215 = vadd.f32 %v147, %v199
    %v216 = vadd.f32 %v148, %v200
    %v217 = vadd.f32 %v149, %v201
    %v218 = vadd.f32 %v150, %v202
    %v219 = vadd.f32 %v151, %v203
    %v220 = vadd.f32 %v152, %v204
    %v221 = vadd.f32 %v153, %v205
    %v222 = vadd.f32 %v154, %v206
    %v223 = vadd.f32 %v155, %v207
    %v224 = vadd.f32 %v156, %v208
    %v225 = vadd.f32 %v157, %v209
    %v226 = vadd.f32 %v158, %v210
    %s227 = sld [smem:[#allocation2 + $0x2]]
    %v228 = vstv %s227
    %v229 = vmul.f32 %v228, %v90
    %v230 = vmul.f32 %v228, %v91
    %v231 = vmul.f32 %v228, %v92
    %v232 = vmul.f32 %v228, %v93
    %v233 = vmul.f32 %v228, %v94
    %v234 = vmul.f32 %v228, %v95
    %v235 = vmul.f32 %v228, %v96
    %v236 = vmul.f32 %v228, %v97
    %v237 = vmul.f32 %v228, %v98
    %v238 = vmul.f32 %v228, %v99
    %v239 = vmul.f32 %v228, %v100
    %v240 = vmul.f32 %v228, %v101
    %v241 = vmul.f32 %v228, %v102
    %v242 = vmul.f32 %v228, %v103
    %v243 = vmul.f32 %v228, %v104
    %v244 = vmul.f32 %v228, %v105
    %v245 = vadd.f32 %v177, %v229
    %v246 = vadd.f32 %v178, %v230
    %v247 = vadd.f32 %v179, %v231
    %v248 = vadd.f32 %v180, %v232
    %v249 = vadd.f32 %v181, %v233
    %v250 = vadd.f32 %v182, %v234
    %v251 = vadd.f32 %v183, %v235
    %v252 = vadd.f32 %v184, %v236
    %v253 = vadd.f32 %v185, %v237
    %v254 = vadd.f32 %v186, %v238
    %v255 = vadd.f32 %v187, %v239
    %v256 = vadd.f32 %v188, %v240
    %v257 = vadd.f32 %v189, %v241
    %v258 = vadd.f32 %v190, %v242
    %v259 = vadd.f32 %v191, %v243
    %v260 = vadd.f32 %v192, %v244
    %s261 = sld [smem:[#allocation6 + $0x2]]
    %v262 = vstv %s261
    %v263 = vmul.f32 %v262, %v90
    %v264 = vmul.f32 %v262, %v91
    %v265 = vmul.f32 %v262, %v92
    %v266 = vmul.f32 %v262, %v93
    %v267 = vmul.f32 %v262, %v94
    %v268 = vmul.f32 %v262, %v95
    %v269 = vmul.f32 %v262, %v96
    %v270 = vmul.f32 %v262, %v97
    %v271 = vmul.f32 %v262, %v98
    %v272 = vmul.f32 %v262, %v99
    %v273 = vmul.f32 %v262, %v100
    %v274 = vmul.f32 %v262, %v101
    %v275 = vmul.f32 %v262, %v102
    %v276 = vmul.f32 %v262, %v103
    %v277 = vmul.f32 %v262, %v104
    %v278 = vmul.f32 %v262, %v105
    %v279 = vadd.f32 %v211, %v263
    %v280 = vadd.f32 %v212, %v264
    %v281 = vadd.f32 %v213, %v265
    %v282 = vadd.f32 %v214, %v266
    %v283 = vadd.f32 %v215, %v267
    %v284 = vadd.f32 %v216, %v268
    %v285 = vadd.f32 %v217, %v269
    %v286 = vadd.f32 %v218, %v270
    %v287 = vadd.f32 %v219, %v271
    %v288 = vadd.f32 %v220, %v272
    %v289 = vadd.f32 %v221, %v273
    %v290 = vadd.f32 %v222, %v274
    %v291 = vadd.f32 %v223, %v275
    %v292 = vadd.f32 %v224, %v276
    %v293 = vadd.f32 %v225, %v277
    %v294 = vadd.f32 %v226, %v278
    %s295 = sld [smem:[#allocation2 + $0x3]]
    %v296 = vstv %s295
    %v297 = vmul.f32 %v296, %v107
    %v298 = vmul.f32 %v296, %v108
    %v299 = vmul.f32 %v296, %v109
    %v300 = vmul.f32 %v296, %v110
    %v301 = vmul.f32 %v296, %v111
    %v302 = vmul.f32 %v296, %v112
    %v303 = vmul.f32 %v296, %v113
    %v304 = vmul.f32 %v296, %v114
    %v305 = vmul.f32 %v296, %v115
    %v306 = vmul.f32 %v296, %v116
    %v307 = vmul.f32 %v296, %v117
    %v308 = vmul.f32 %v296, %v118
    %v309 = vmul.f32 %v296, %v119
    %v310 = vmul.f32 %v296, %v120
    %v311 = vmul.f32 %v296, %v121
    %v312 = vmul.f32 %v296, %v122
    %v313 = vadd.f32 %v245, %v297
    %v314 = vadd.f32 %v246, %v298
    %v315 = vadd.f32 %v247, %v299
    %v316 = vadd.f32 %v248, %v300
    %v317 = vadd.f32 %v249, %v301
    %v318 = vadd.f32 %v250, %v302
    %v319 = vadd.f32 %v251, %v303
    %v320 = vadd.f32 %v252, %v304
    %v321 = vadd.f32 %v253, %v305
    %v322 = vadd.f32 %v254, %v306
    %v323 = vadd.f32 %v255, %v307
    %v324 = vadd.f32 %v256, %v308
    %v325 = vadd.f32 %v257, %v309
    %v326 = vadd.f32 %v258, %v310
    %v327 = vadd.f32 %v259, %v311
    %v328 = vadd.f32 %v260, %v312
    %s329 = sld [smem:[#allocation6 + $0x3]]
    %v330 = vstv %s329
    %v331 = vmul.f32 %v330, %v107
    %v332 = vmul.f32 %v330, %v108
    %v333 = vmul.f32 %v330, %v109
    %v334 = vmul.f32 %v330, %v110
    %v335 = vmul.f32 %v330, %v111
    %v336 = vmul.f32 %v330, %v112
    %v337 = vmul.f32 %v330, %v113
    %v338 = vmul.f32 %v330, %v114
    %v339 = vmul.f32 %v330, %v115
    %v340 = vmul.f32 %v330, %v116
    %v341 = vmul.f32 %v330, %v117
    %v342 = vmul.f32 %v330, %v118
    %v343 = vmul.f32 %v330, %v119
    %v344 = vmul.f32 %v330, %v120
    %v345 = vmul.f32 %v330, %v121
    %v346 = vmul.f32 %v330, %v122
    %v347 = vadd.f32 %v279, %v331
    %v348 = vadd.f32 %v280, %v332
    %v349 = vadd.f32 %v281, %v333
    %v350 = vadd.f32 %v282, %v334
    %v351 = vadd.f32 %v283, %v335
    %v352 = vadd.f32 %v284, %v336
    %v353 = vadd.f32 %v285, %v337
    %v354 = vadd.f32 %v286, %v338
    %v355 = vadd.f32 %v287, %v339
    %v356 = vadd.f32 %v288, %v340
    %v357 = vadd.f32 %v289, %v341
    %v358 = vadd.f32 %v290, %v342
    %v359 = vadd.f32 %v291, %v343
    %v360 = vadd.f32 %v292, %v344
    %v361 = vadd.f32 %v293, %v345
    %v362 = vadd.f32 %v294, %v346
    %363 = vmatpush.msra.mxu0 %v362
    %364 = vmatpush.msra.mxu0 %v361
    %365 = vmatpush.msra.mxu0 %v360
    %366 = vmatpush.msra.mxu0 %v359
    %367 = vmatpush.msra.mxu0 %v358
    %368 = vmatpush.msra.mxu0 %v357
    %369 = vmatpush.msra.mxu0 %v356
    %370 = vmatpush.msra.mxu0 %v355
    %371 = vmatpush.msra.mxu0 %v354
    %372 = vmatpush.msra.mxu0 %v353
    %373 = vmatpush.msra.mxu0 %v352
    %374 = vmatpush.msra.mxu0 %v351
    %375 = vmatpush.msra.mxu0 %v350
    %376 = vmatpush.msra.mxu0 %v349
    %377 = vmatpush.msra.mxu0 %v348
    %378 = vmatpush.msra.mxu0 %v347
    %379 = vmatmul.f32.gmra.mxu0 %v313
    %v380 = vpop.f32.mrf.mxu0
    %v381 = vadd.f32 0.0, %v380
    %382 = vmatmul.f32.gmra.mxu0 %v314
    %v383 = vpop.f32.mrf.mxu0
    %v384 = vadd.f32 0.0, %v383
    %385 = vmatmul.f32.gmra.mxu0 %v315
    %v386 = vpop.f32.mrf.mxu0
    %v387 = vadd.f32 0.0, %v386
    %388 = vmatmul.f32.gmra.mxu0 %v316
    %v389 = vpop.f32.mrf.mxu0
    %v390 = vadd.f32 0.0, %v389
    %391 = vmatmul.f32.gmra.mxu0 %v317
    %v392 = vpop.f32.mrf.mxu0
    %v393 = vadd.f32 0.0, %v392
    %394 = vmatmul.f32.gmra.mxu0 %v318
    %v395 = vpop.f32.mrf.mxu0
    %v396 = vadd.f32 0.0, %v395
    %397 = vmatmul.f32.gmra.mxu0 %v319
    %v398 = vpop.f32.mrf.mxu0
    %v399 = vadd.f32 0.0, %v398
    %400 = vmatmul.f32.gmra.mxu0 %v320
    %v401 = vpop.f32.mrf.mxu0
    %v402 = vadd.f32 0.0, %v401
    %403 = vmatmul.f32.gmra.mxu0 %v321
    %v404 = vpop.f32.mrf.mxu0
    %v405 = vadd.f32 0.0, %v404
    %406 = vmatmul.f32.gmra.mxu0 %v322
    %v407 = vpop.f32.mrf.mxu0
    %v408 = vadd.f32 0.0, %v407
    %409 = vmatmul.f32.gmra.mxu0 %v323
    %v410 = vpop.f32.mrf.mxu0
    %v411 = vadd.f32 0.0, %v410
    %412 = vmatmul.f32.gmra.mxu0 %v324
    %v413 = vpop.f32.mrf.mxu0
    %v414 = vadd.f32 0.0, %v413
    %415 = vmatmul.f32.gmra.mxu0 %v325
    %v416 = vpop.f32.mrf.mxu0
    %v417 = vadd.f32 0.0, %v416
    %418 = vmatmul.f32.gmra.mxu0 %v326
    %v419 = vpop.f32.mrf.mxu0
    %v420 = vadd.f32 0.0, %v419
    %421 = vmatmul.f32.gmra.mxu0 %v327
    %v422 = vpop.f32.mrf.mxu0
    %v423 = vadd.f32 0.0, %v422
    %424 = vmatmul.f32.gmra.mxu0 %v328
    %v425 = vpop.f32.mrf.mxu0
    %v426 = vadd.f32 0.0, %v425
    %427 = vdwg.mxu0
    %428 = vst [vmem:[#allocation9] sm:$0xff] %v381
    %429 = vst [vmem:[#allocation9 + $0x8] sm:$0xff] %v384
    %430 = vst [vmem:[#allocation9 + $0x10] sm:$0xff] %v387
    %431 = vst [vmem:[#allocation9 + $0x18] sm:$0xff] %v390
    %432 = vst [vmem:[#allocation9 + $0x20] sm:$0xff] %v393
    %433 = vst [vmem:[#allocation9 + $0x28] sm:$0xff] %v396
    %434 = vst [vmem:[#allocation9 + $0x30] sm:$0xff] %v399
    %435 = vst [vmem:[#allocation9 + $0x38] sm:$0xff] %v402
    %436 = vst [vmem:[#allocation9 + $0x40] sm:$0xff] %v405
    %437 = vst [vmem:[#allocation9 + $0x48] sm:$0xff] %v408
    %438 = vst [vmem:[#allocation9 + $0x50] sm:$0xff] %v411
    %439 = vst [vmem:[#allocation9 + $0x58] sm:$0xff] %v414
    %440 = vst [vmem:[#allocation9 + $0x60] sm:$0xff] %v417
    %441 = vst [vmem:[#allocation9 + $0x68] sm:$0xff] %v420
    %442 = vst [vmem:[#allocation9 + $0x70] sm:$0xff] %v423
    %443 = vst [vmem:[#allocation9 + $0x78] sm:$0xff] %v426
    %s444 = sld [smem:[#allocation2 + $0x80]]
    %v445 = vstv %s444
    %v446 = vmul.f32 %v445, %v56
    %v447 = vmul.f32 %v445, %v57
    %v448 = vmul.f32 %v445, %v58
    %v449 = vmul.f32 %v445, %v59
    %v450 = vmul.f32 %v445, %v60
    %v451 = vmul.f32 %v445, %v61
    %v452 = vmul.f32 %v445, %v62
    %v453 = vmul.f32 %v445, %v63
    %v454 = vmul.f32 %v445, %v64
    %v455 = vmul.f32 %v445, %v65
    %v456 = vmul.f32 %v445, %v66
    %v457 = vmul.f32 %v445, %v67
    %v458 = vmul.f32 %v445, %v68
    %v459 = vmul.f32 %v445, %v69
    %v460 = vmul.f32 %v445, %v70
    %v461 = vmul.f32 %v445, %v71
    %s462 = sld [smem:[#allocation6 + $0x80]]
    %v463 = vstv %s462
    %v464 = vmul.f32 %v463, %v56
    %v465 = vmul.f32 %v463, %v57
    %v466 = vmul.f32 %v463, %v58
    %v467 = vmul.f32 %v463, %v59
    %v468 = vmul.f32 %v463, %v60
    %v469 = vmul.f32 %v463, %v61
    %v470 = vmul.f32 %v463, %v62
    %v471 = vmul.f32 %v463, %v63
    %v472 = vmul.f32 %v463, %v64
    %v473 = vmul.f32 %v463, %v65
    %v474 = vmul.f32 %v463, %v66
    %v475 = vmul.f32 %v463, %v67
    %v476 = vmul.f32 %v463, %v68
    %v477 = vmul.f32 %v463, %v69
    %v478 = vmul.f32 %v463, %v70
    %v479 = vmul.f32 %v463, %v71
    %s480 = sld [smem:[#allocation2 + $0x81]]
    %v481 = vstv %s480
    %v482 = vmul.f32 %v481, %v73
    %v483 = vmul.f32 %v481, %v74
    %v484 = vmul.f32 %v481, %v75
    %v485 = vmul.f32 %v481, %v76
    %v486 = vmul.f32 %v481, %v77
    %v487 = vmul.f32 %v481, %v78
    %v488 = vmul.f32 %v481, %v79
    %v489 = vmul.f32 %v481, %v80
    %v490 = vmul.f32 %v481, %v81
    %v491 = vmul.f32 %v481, %v82
    %v492 = vmul.f32 %v481, %v83
    %v493 = vmul.f32 %v481, %v84
    %v494 = vmul.f32 %v481, %v85
    %v495 = vmul.f32 %v481, %v86
    %v496 = vmul.f32 %v481, %v87
    %v497 = vmul.f32 %v481, %v88
    %v498 = vadd.f32 %v446, %v482
    %v499 = vadd.f32 %v447, %v483
    %v500 = vadd.f32 %v448, %v484
    %v501 = vadd.f32 %v449, %v485
    %v502 = vadd.f32 %v450, %v486
    %v503 = vadd.f32 %v451, %v487
    %v504 = vadd.f32 %v452, %v488
    %v505 = vadd.f32 %v453, %v489
    %v506 = vadd.f32 %v454, %v490
    %v507 = vadd.f32 %v455, %v491
    %v508 = vadd.f32 %v456, %v492
    %v509 = vadd.f32 %v457, %v493
    %v510 = vadd.f32 %v458, %v494
    %v511 = vadd.f32 %v459, %v495
    %v512 = vadd.f32 %v460, %v496
    %v513 = vadd.f32 %v461, %v497
    %s514 = sld [smem:[#allocation6 + $0x81]]
    %v515 = vstv %s514
    %v516 = vmul.f32 %v515, %v73
    %v517 = vmul.f32 %v515, %v74
    %v518 = vmul.f32 %v515, %v75
    %v519 = vmul.f32 %v515, %v76
    %v520 = vmul.f32 %v515, %v77
    %v521 = vmul.f32 %v515, %v78
    %v522 = vmul.f32 %v515, %v79
    %v523 = vmul.f32 %v515, %v80
    %v524 = vmul.f32 %v515, %v81
    %v525 = vmul.f32 %v515, %v82
    %v526 = vmul.f32 %v515, %v83
    %v527 = vmul.f32 %v515, %v84
    %v528 = vmul.f32 %v515, %v85
    %v529 = vmul.f32 %v515, %v86
    %v530 = vmul.f32 %v515, %v87
    %v531 = vmul.f32 %v515, %v88
    %v532 = vadd.f32 %v464, %v516
    %v533 = vadd.f32 %v465, %v517
    %v534 = vadd.f32 %v466, %v518
    %v535 = vadd.f32 %v467, %v519
    %v536 = vadd.f32 %v468, %v520
    %v537 = vadd.f32 %v469, %v521
    %v538 = vadd.f32 %v470, %v522
    %v539 = vadd.f32 %v471, %v523
    %v540 = vadd.f32 %v472, %v524
    %v541 = vadd.f32 %v473, %v525
    %v542 = vadd.f32 %v474, %v526
    %v543 = vadd.f32 %v475, %v527
    %v544 = vadd.f32 %v476, %v528
    %v545 = vadd.f32 %v477, %v529
    %v546 = vadd.f32 %v478, %v530
    %v547 = vadd.f32 %v479, %v531
    %s548 = sld [smem:[#allocation2 + $0x82]]
    %v549 = vstv %s548
    %v550 = vmul.f32 %v549, %v90
    %v551 = vmul.f32 %v549, %v91
    %v552 = vmul.f32 %v549, %v92
    %v553 = vmul.f32 %v549, %v93
    %v554 = vmul.f32 %v549, %v94
    %v555 = vmul.f32 %v549, %v95
    %v556 = vmul.f32 %v549, %v96
    %v557 = vmul.f32 %v549, %v97
    %v558 = vmul.f32 %v549, %v98
    %v559 = vmul.f32 %v549, %v99
    %v560 = vmul.f32 %v549, %v100
    %v561 = vmul.f32 %v549, %v101
    %v562 = vmul.f32 %v549, %v102
    %v563 = vmul.f32 %v549, %v103
    %v564 = vmul.f32 %v549, %v104
    %v565 = vmul.f32 %v549, %v105
    %v566 = vadd.f32 %v498, %v550
    %v567 = vadd.f32 %v499, %v551
    %v568 = vadd.f32 %v500, %v552
    %v569 = vadd.f32 %v501, %v553
    %v570 = vadd.f32 %v502, %v554
    %v571 = vadd.f32 %v503, %v555
    %v572 = vadd.f32 %v504, %v556
    %v573 = vadd.f32 %v505, %v557
    %v574 = vadd.f32 %v506, %v558
    %v575 = vadd.f32 %v507, %v559
    %v576 = vadd.f32 %v508, %v560
    %v577 = vadd.f32 %v509, %v561
    %v578 = vadd.f32 %v510, %v562
    %v579 = vadd.f32 %v511, %v563
    %v580 = vadd.f32 %v512, %v564
    %v581 = vadd.f32 %v513, %v565
    %s582 = sld [smem:[#allocation6 + $0x82]]
    %v583 = vstv %s582
    %v584 = vmul.f32 %v583, %v90
    %v585 = vmul.f32 %v583, %v91
    %v586 = vmul.f32 %v583, %v92
    %v587 = vmul.f32 %v583, %v93
    %v588 = vmul.f32 %v583, %v94
    %v589 = vmul.f32 %v583, %v95
    %v590 = vmul.f32 %v583, %v96
    %v591 = vmul.f32 %v583, %v97
    %v592 = vmul.f32 %v583, %v98
    %v593 = vmul.f32 %v583, %v99
    %v594 = vmul.f32 %v583, %v100
    %v595 = vmul.f32 %v583, %v101
    %v596 = vmul.f32 %v583, %v102
    %v597 = vmul.f32 %v583, %v103
    %v598 = vmul.f32 %v583, %v104
    %v599 = vmul.f32 %v583, %v105
    %v600 = vadd.f32 %v532, %v584
    %v601 = vadd.f32 %v533, %v585
    %v602 = vadd.f32 %v534, %v586
    %v603 = vadd.f32 %v535, %v587
    %v604 = vadd.f32 %v536, %v588
    %v605 = vadd.f32 %v537, %v589
    %v606 = vadd.f32 %v538, %v590
    %v607 = vadd.f32 %v539, %v591
    %v608 = vadd.f32 %v540, %v592
    %v609 = vadd.f32 %v541, %v593
    %v610 = vadd.f32 %v542, %v594
    %v611 = vadd.f32 %v543, %v595
    %v612 = vadd.f32 %v544, %v596
    %v613 = vadd.f32 %v545, %v597
    %v614 = vadd.f32 %v546, %v598
    %v615 = vadd.f32 %v547, %v599
    %s616 = sld [smem:[#allocation2 + $0x83]]
    %v617 = vstv %s616
    %v618 = vmul.f32 %v617, %v107
    %v619 = vmul.f32 %v617, %v108
    %v620 = vmul.f32 %v617, %v109
    %v621 = vmul.f32 %v617, %v110
    %v622 = vmul.f32 %v617, %v111
    %v623 = vmul.f32 %v617, %v112
    %v624 = vmul.f32 %v617, %v113
    %v625 = vmul.f32 %v617, %v114
    %v626 = vmul.f32 %v617, %v115
    %v627 = vmul.f32 %v617, %v116
    %v628 = vmul.f32 %v617, %v117
    %v629 = vmul.f32 %v617, %v118
    %v630 = vmul.f32 %v617, %v119
    %v631 = vmul.f32 %v617, %v120
    %v632 = vmul.f32 %v617, %v121
    %v633 = vmul.f32 %v617, %v122
    %v634 = vadd.f32 %v566, %v618
    %v635 = vadd.f32 %v567, %v619
    %v636 = vadd.f32 %v568, %v620
    %v637 = vadd.f32 %v569, %v621
    %v638 = vadd.f32 %v570, %v622
    %v639 = vadd.f32 %v571, %v623
    %v640 = vadd.f32 %v572, %v624
    %v641 = vadd.f32 %v573, %v625
    %v642 = vadd.f32 %v574, %v626
    %v643 = vadd.f32 %v575, %v627
    %v644 = vadd.f32 %v576, %v628
    %v645 = vadd.f32 %v577, %v629
    %v646 = vadd.f32 %v578, %v630
    %v647 = vadd.f32 %v579, %v631
    %v648 = vadd.f32 %v580, %v632
    %v649 = vadd.f32 %v581, %v633
    %s650 = sld [smem:[#allocation6 + $0x83]]
    %v651 = vstv %s650
    %v652 = vmul.f32 %v651, %v107
    %v653 = vmul.f32 %v651, %v108
    %v654 = vmul.f32 %v651, %v109
    %v655 = vmul.f32 %v651, %v110
    %v656 = vmul.f32 %v651, %v111
    %v657 = vmul.f32 %v651, %v112
    %v658 = vmul.f32 %v651, %v113
    %v659 = vmul.f32 %v651, %v114
    %v660 = vmul.f32 %v651, %v115
    %v661 = vmul.f32 %v651, %v116
    %v662 = vmul.f32 %v651, %v117
    %v663 = vmul.f32 %v651, %v118
    %v664 = vmul.f32 %v651, %v119
    %v665 = vmul.f32 %v651, %v120
    %v666 = vmul.f32 %v651, %v121
    %v667 = vmul.f32 %v651, %v122
    %v668 = vadd.f32 %v600, %v652
    %v669 = vadd.f32 %v601, %v653
    %v670 = vadd.f32 %v602, %v654
    %v671 = vadd.f32 %v603, %v655
    %v672 = vadd.f32 %v604, %v656
    %v673 = vadd.f32 %v605, %v657
    %v674 = vadd.f32 %v606, %v658
    %v675 = vadd.f32 %v607, %v659
    %v676 = vadd.f32 %v608, %v660
    %v677 = vadd.f32 %v609, %v661
    %v678 = vadd.f32 %v610, %v662
    %v679 = vadd.f32 %v611, %v663
    %v680 = vadd.f32 %v612, %v664
    %v681 = vadd.f32 %v613, %v665
    %v682 = vadd.f32 %v614, %v666
    %v683 = vadd.f32 %v615, %v667
    %684 = vmatpush.msra.mxu0 %v683
    %685 = vmatpush.msra.mxu0 %v682
    %686 = vmatpush.msra.mxu0 %v681
    %687 = vmatpush.msra.mxu0 %v680
    %688 = vmatpush.msra.mxu0 %v679
    %689 = vmatpush.msra.mxu0 %v678
    %690 = vmatpush.msra.mxu0 %v677
    %691 = vmatpush.msra.mxu0 %v676
    %692 = vmatpush.msra.mxu0 %v675
    %693 = vmatpush.msra.mxu0 %v674
    %694 = vmatpush.msra.mxu0 %v673
    %695 = vmatpush.msra.mxu0 %v672
    %696 = vmatpush.msra.mxu0 %v671
    %697 = vmatpush.msra.mxu0 %v670
    %698 = vmatpush.msra.mxu0 %v669
    %699 = vmatpush.msra.mxu0 %v668
    %700 = vmatmul.f32.gmra.mxu0 %v634
    %v701 = vpop.f32.mrf.mxu0
    %v702 = vadd.f32 0.0, %v701
    %703 = vmatmul.f32.gmra.mxu0 %v635
    %v704 = vpop.f32.mrf.mxu0
    %v705 = vadd.f32 0.0, %v704
    %706 = vmatmul.f32.gmra.mxu0 %v636
    %v707 = vpop.f32.mrf.mxu0
    %v708 = vadd.f32 0.0, %v707
    %709 = vmatmul.f32.gmra.mxu0 %v637
    %v710 = vpop.f32.mrf.mxu0
    %v711 = vadd.f32 0.0, %v710
    %712 = vmatmul.f32.gmra.mxu0 %v638
    %v713 = vpop.f32.mrf.mxu0
    %v714 = vadd.f32 0.0, %v713
    %715 = vmatmul.f32.gmra.mxu0 %v639
    %v716 = vpop.f32.mrf.mxu0
    %v717 = vadd.f32 0.0, %v716
    %718 = vmatmul.f32.gmra.mxu0 %v640
    %v719 = vpop.f32.mrf.mxu0
    %v720 = vadd.f32 0.0, %v719
    %721 = vmatmul.f32.gmra.mxu0 %v641
    %v722 = vpop.f32.mrf.mxu0
    %v723 = vadd.f32 0.0, %v722
    %724 = vmatmul.f32.gmra.mxu0 %v642
    %v725 = vpop.f32.mrf.mxu0
    %v726 = vadd.f32 0.0, %v725
    %727 = vmatmul.f32.gmra.mxu0 %v643
    %v728 = vpop.f32.mrf.mxu0
    %v729 = vadd.f32 0.0, %v728
    %730 = vmatmul.f32.gmra.mxu0 %v644
    %v731 = vpop.f32.mrf.mxu0
    %v732 = vadd.f32 0.0, %v731
    %733 = vmatmul.f32.gmra.mxu0 %v645
    %v734 = vpop.f32.mrf.mxu0
    %v735 = vadd.f32 0.0, %v734
    %736 = vmatmul.f32.gmra.mxu0 %v646
    %v737 = vpop.f32.mrf.mxu0
    %v738 = vadd.f32 0.0, %v737
    %739 = vmatmul.f32.gmra.mxu0 %v647
    %v740 = vpop.f32.mrf.mxu0
    %v741 = vadd.f32 0.0, %v740
    %742 = vmatmul.f32.gmra.mxu0 %v648
    %v743 = vpop.f32.mrf.mxu0
    %v744 = vadd.f32 0.0, %v743
    %745 = vmatmul.f32.gmra.mxu0 %v649
    %v746 = vpop.f32.mrf.mxu0
    %v747 = vadd.f32 0.0, %v746
    %748 = vdwg.mxu0
    %s749 = scalar_lea.vmem [#allocation9], 128
    %750 = vst [vmem:[%s749] sm:$0xff] %v702
    %751 = vst [vmem:[%s749 + $0x8] sm:$0xff] %v705
    %752 = vst [vmem:[%s749 + $0x10] sm:$0xff] %v708
    %753 = vst [vmem:[%s749 + $0x18] sm:$0xff] %v711
    %754 = vst [vmem:[%s749 + $0x20] sm:$0xff] %v714
    %755 = vst [vmem:[%s749 + $0x28] sm:$0xff] %v717
    %756 = vst [vmem:[%s749 + $0x30] sm:$0xff] %v720
    %757 = vst [vmem:[%s749 + $0x38] sm:$0xff] %v723
    %758 = vst [vmem:[%s749 + $0x40] sm:$0xff] %v726
    %759 = vst [vmem:[%s749 + $0x48] sm:$0xff] %v729
    %760 = vst [vmem:[%s749 + $0x50] sm:$0xff] %v732
    %761 = vst [vmem:[%s749 + $0x58] sm:$0xff] %v735
    %762 = vst [vmem:[%s749 + $0x60] sm:$0xff] %v738
    %763 = vst [vmem:[%s749 + $0x68] sm:$0xff] %v741
    %764 = vst [vmem:[%s749 + $0x70] sm:$0xff] %v744
    %765 = vst [vmem:[%s749 + $0x78] sm:$0xff] %v747
    // Predicated region
    $region26: #{tpu_custom_call.1} parent=1 // pred_check
      _
    $region27: #{tpu_custom_call.1} parent=1 // pred_check_branch
      %767 = sbr.rel (0) target = $region29
    $region28: #{tpu_custom_call.1} parent=1 // pred_region
      %769 = vsyncadd [#allocation4], 0
      %s770 = sshll.u32 [#allocation9], 4
      %s771 = int_to_ptr.vmem [resolvable:$true] %s770
      %s772 = sshll.u32 %s3, 4
      %s773 = int_to_ptr.hbm [resolvable:$true] %s772
      %778 = dma.vmem_to_hbm [thread:$0]  %s771, 4096, %s773, [#allocation4], 128, 128, 8
    $region29: #{tpu_custom_call.1} parent=1 // pred_fallthru
      _
    // Predicated region
    $region30: #{tpu_custom_call.1} parent=1 // pred_check
      _
    $region31: #{tpu_custom_call.1} parent=1 // pred_check_branch
      %780 = sbr.rel (0) target = $region33
    $region32: #{tpu_custom_call.1} parent=1 // pred_region
      %782 = dma.done [#allocation4], 4096
    $region33: #{tpu_custom_call.1} parent=1 // pred_fallthru
      _
    %783 = vsyncpa [#allocation3], 1
    %784 = vsyncpa [#allocation4], 1
    %785 = vsyncpa [#allocation5], 1
    %786 = vsyncpa [#allocation7], 1

</llo_original>
